<compile_context>
chip_gen: v7x
topology: tpu7x:2x2x1
jax: 0.10.0
libtpu: 0.0.40
codegen_flags: <defaults>
</compile_context>

<pallas_src>
import jax
import jax.numpy as jnp
from jax.experimental import pallas as pl
from jax.experimental.pallas import tpu as pltpu


def film_factor_kernel(cond_ref, wr_ref, wb_ref, br_ref, bb_ref, r_ref, b_ref):
    # cond: (B, C)   wr/wb: (C, F)   br/bb: (1, F)   ->   r/b: (B, F, 1) f32
    cond = cond_ref[...]
    r = jnp.dot(cond, wr_ref[...], preferred_element_type=jnp.float32) + br_ref[...]
    b = jnp.dot(cond, wb_ref[...], preferred_element_type=jnp.float32) + bb_ref[...]
    # (B, F) -> (B, F, 1): the lane->sublane relayout happens ONCE here,
    # not in the per-tile hot path.
    r_ref[...] = r[:, :, None]
    b_ref[...] = b[:, :, None]


def film_mod_kernel(r_ref, b_ref, feat_ref, out_ref):
    # r/b: (1, F, 1) f32   feat/out: (1, F, tT)  -- pure per-channel FMA.
    feat = feat_ref[...]
    r = r_ref[...].astype(feat.dtype)   # keep the FMA native-width (bf16 on v6e/v7x)
    b = b_ref[...].astype(feat.dtype)
    out_ref[...] = (r * feat + b).astype(out_ref.dtype)
    # TODO(synk): on v5e with bf16 features, promote the tile to f32 here (no bf16 VPU).


def film_forward(feature, condition, w, bias):
    """FiLM forward.

    feature:   (B, F, T)  channel-first feature map
    condition: (B, C)
    w:         (C, 2F)    film_fc weight, pre-transposed so cond @ w works
    bias:      (2F,)      film_fc bias
    """
    B, F, T = feature.shape

    # Split the fused Linear into the r / b halves outside the kernel so no
    # sub-lane slicing of a 2F vector is needed in-kernel.
    w_r, w_b = w[:, :F], w[:, F:]
    b_r, b_b = bias[:F].reshape(1, F), bias[F:].reshape(1, F)

    # ---- Stage 1: FiLM factors (tiny matmul, run once, un-gridded) ----------
    vmem = pl.BlockSpec(memory_space=pltpu.MemorySpace.VMEM)
    r, b = pl.pallas_call(
        film_factor_kernel,
        out_shape=(jax.ShapeDtypeStruct((B, F, 1), jnp.float32),
                   jax.ShapeDtypeStruct((B, F, 1), jnp.float32)),
        in_specs=[vmem, vmem, vmem, vmem, vmem],
        out_specs=(vmem, vmem),
    )(condition, w_r, w_b, b_r, b_b)

    # ---- Stage 2: lane-dense, gridded, double-buffered modulation -----------
    LANE = 128
    itemsize = jnp.dtype(feature.dtype).itemsize
    T_pad = ((T + LANE - 1) // LANE) * LANE
    # Largest T-tile in {512, 256, 128} that divides T_pad and keeps one block
    # <= ~4 MiB (so double-buffered in+out stays well inside v7x's 64 MiB VMEM).
    tT = next((tt for tt in (512, 256, 128)
               if T_pad % tt == 0 and F * tt * itemsize <= 4 * 1024 * 1024), 128)

    feat_p = feature if T_pad == T else jnp.pad(
        feature, ((0, 0), (0, 0), (0, T_pad - T)))

    grid = (B, T_pad // tT)
    out = pl.pallas_call(
        film_mod_kernel,
        out_shape=jax.ShapeDtypeStruct((B, F, T_pad), feature.dtype),
        grid=grid,
        in_specs=[
            pl.BlockSpec((1, F, 1), lambda bi, ti: (bi, 0, 0)),    # r (reused across ti)
            pl.BlockSpec((1, F, 1), lambda bi, ti: (bi, 0, 0)),    # b
            pl.BlockSpec((1, F, tT), lambda bi, ti: (bi, 0, ti)),  # feature tile
        ],
        out_specs=pl.BlockSpec((1, F, tT), lambda bi, ti: (bi, 0, ti)),
        compiler_params=pltpu.CompilerParams(
            dimension_semantics=("parallel", "parallel"),
            vmem_limit_bytes=32 * 1024 * 1024),
        cost_estimate=pl.CostEstimate(
            flops=2 * B * F * T_pad,
            transcendentals=0,
            bytes_accessed=(2 * B * F * T_pad) * itemsize),
    )(r, b, feat_p)

    return out if T_pad == T else out[:, :, :T]


if __name__ == "__main__":
    # Small, module-consistent shapes.
    B = 2              # batch
    COND = 32          # condition_len
    FEAT = 16          # feature_len
    T = 8              # time / sequence length of the feature map

    key = jax.random.PRNGKey(0)
    k_feat, k_cond, k_w, k_b = jax.random.split(key, 4)

    feature = jax.random.normal(k_feat, (B, FEAT, T), dtype=jnp.float32)
    condition = jax.random.normal(k_cond, (B, COND), dtype=jnp.float32)

    # film_fc: Linear(COND -> 2*FEAT), weight stored pre-transposed (COND, 2F).
    bound = 1.0 / jnp.sqrt(COND)
    w = jax.random.uniform(k_w, (COND, 2 * FEAT), jnp.float32, -bound, bound)
    bias = jax.random.uniform(k_b, (2 * FEAT,), jnp.float32, -bound, bound)

    out = film_forward(feature, condition, w, bias)
    out = jax.block_until_ready(out)

    # Pure-JAX reference for correctness.
    film_ref = condition @ w + bias                      # (B, 2F)
    r_ref, b_ref = film_ref[:, :FEAT], film_ref[:, FEAT:]
    ref = r_ref[:, :, None] * feature + b_ref[:, :, None]

    assert out.shape == (B, FEAT, T)
    assert jnp.allclose(out, ref, atol=1e-5, rtol=1e-5)
    print("KERNEL_OK")
</pallas_src>

<mosaic_0001>
module attributes {stable_mosaic.version = 11 : i64} {
  func.func @film_factor_kernel(%arg0: memref<2x32xf32, #tpu.memory_space<vmem>>, %arg1: memref<32x16xf32, #tpu.memory_space<vmem>>, %arg2: memref<32x16xf32, #tpu.memory_space<vmem>>, %arg3: memref<1x16xf32, #tpu.memory_space<vmem>>, %arg4: memref<1x16xf32, #tpu.memory_space<vmem>>, %arg5: memref<2x16x1xf32, #tpu.memory_space<vmem>>, %arg6: memref<2x16x1xf32, #tpu.memory_space<vmem>>) attributes {dimension_semantics = [], scalar_prefetch = 0 : i64, scratch_operands = 0 : i64, tpu.core_type = #tpu.core_type<tc>} {
    %c0 = arith.constant 0 : index
    %c0_0 = arith.constant 0 : index
    %0 = vector.load %arg0[%c0, %c0_0] : memref<2x32xf32, #tpu.memory_space<vmem>>, vector<2x32xf32>
    %c0_1 = arith.constant 0 : index
    %c0_2 = arith.constant 0 : index
    %1 = vector.load %arg1[%c0_1, %c0_2] : memref<32x16xf32, #tpu.memory_space<vmem>>, vector<32x16xf32>
    %cst = arith.constant dense<0.000000e+00> : vector<2x16xf32>
    %2 = tpu.matmul %0, %1, %cst {dimension_numbers = #tpu.dot_dimension_numbers<[1], [0], [0], [1], [0, 0, 1, 1], [], []>} : vector<2x32xf32>, vector<32x16xf32>, vector<2x16xf32> -> vector<2x16xf32>
    %c0_3 = arith.constant 0 : index
    %c0_4 = arith.constant 0 : index
    %3 = vector.load %arg3[%c0_3, %c0_4] : memref<1x16xf32, #tpu.memory_space<vmem>>, vector<1x16xf32>
    %4 = vector.broadcast %3 : vector<1x16xf32> to vector<2x16xf32>
    %5 = arith.addf %2, %4 : vector<2x16xf32>
    %c0_5 = arith.constant 0 : index
    %c0_6 = arith.constant 0 : index
    %6 = vector.load %arg2[%c0_5, %c0_6] : memref<32x16xf32, #tpu.memory_space<vmem>>, vector<32x16xf32>
    %cst_7 = arith.constant dense<0.000000e+00> : vector<2x16xf32>
    %7 = tpu.matmul %0, %6, %cst_7 {dimension_numbers = #tpu.dot_dimension_numbers<[1], [0], [0], [1], [0, 0, 1, 1], [], []>} : vector<2x32xf32>, vector<32x16xf32>, vector<2x16xf32> -> vector<2x16xf32>
    %c0_8 = arith.constant 0 : index
    %c0_9 = arith.constant 0 : index
    %8 = vector.load %arg4[%c0_8, %c0_9] : memref<1x16xf32, #tpu.memory_space<vmem>>, vector<1x16xf32>
    %9 = vector.broadcast %8 : vector<1x16xf32> to vector<2x16xf32>
    %10 = arith.addf %7, %9 : vector<2x16xf32>
    %11 = vector.shape_cast %5 : vector<2x16xf32> to vector<2x16x1xf32>
    %c0_10 = arith.constant 0 : index
    %c0_11 = arith.constant 0 : index
    %c0_12 = arith.constant 0 : index
    %12 = vector.load %arg5[%c0_10, %c0_11, %c0_12] : memref<2x16x1xf32, #tpu.memory_space<vmem>>, vector<2x16x1xf32>
    tpu.vector_store %arg5[%c0_10, %c0_11, %c0_12], %11 {strides = array<i32>} : memref<2x16x1xf32, #tpu.memory_space<vmem>>, vector<2x16x1xf32>,
    %13 = vector.shape_cast %10 : vector<2x16xf32> to vector<2x16x1xf32>
    %c0_13 = arith.constant 0 : index
    %c0_14 = arith.constant 0 : index
    %c0_15 = arith.constant 0 : index
    %14 = vector.load %arg6[%c0_13, %c0_14, %c0_15] : memref<2x16x1xf32, #tpu.memory_space<vmem>>, vector<2x16x1xf32>
    tpu.vector_store %arg6[%c0_13, %c0_14, %c0_15], %13 {strides = array<i32>} : memref<2x16x1xf32, #tpu.memory_space<vmem>>, vector<2x16x1xf32>,
    return
  }
}

</mosaic_0001>

<llo_original>
// kernel: tpu_custom_call.1
$region0: #{tpu_custom_call.1}
  #allocation0 [shape = 'u32[]', space=smem, size = 0x4, offset = 0x4, fixed_abs, tag = 'smem constant byte address 0x4 - core index']
  #allocation1 [shape = 'u32[144,128]{1,0:T(1,128)}', space=vmem, size = 0x12000, scoped, tag = 'internal scratch']
  %s0 = inlined_call_operand.vmem [shape: f32[2,32], index: 0, kind: input, shape index: {}]
  %s1 = inlined_call_operand.vmem [shape: f32[32,16], index: 1, kind: input, shape index: {}]
  %s2 = inlined_call_operand.vmem [shape: f32[32,16], index: 2, kind: input, shape index: {}]
  %s3 = inlined_call_operand.vmem [shape: f32[1,16], index: 3, kind: input, shape index: {}]
  %s4 = inlined_call_operand.vmem [shape: f32[1,16], index: 4, kind: input, shape index: {}]
  %s5 = inlined_call_operand.vmem [shape: f32[2,16,1], index: 5, kind: output, shape index: {0}]
  %s6 = inlined_call_operand.vmem [shape: f32[2,16,1], index: 6, kind: output, shape index: {1}]
  %7 = xla_tuple %s5, %s6
  %s8 = sld [smem:[#allocation0]]
  $region38: #{tpu_custom_call.1} parent=0
    _
  %s10 = ssub.s32 1, %s8
  %s11 = scalar_select 0, %s10, %s8
  // Predicated region
  $region2: #{tpu_custom_call.1} parent=0 // pred_check
    _
  $region3: #{tpu_custom_call.1} parent=0 // pred_check_branch
    %13 = sbr.rel (0) target = $region5
  $region4: #{tpu_custom_call.1} parent=0 // pred_region
    _
  $region5: #{tpu_custom_call.1} parent=0 // pred_fallthru
    _
  // Predicated region
  $region6: #{tpu_custom_call.1} parent=0 // pred_check
    _
  $region7: #{tpu_custom_call.1} parent=0 // pred_check_branch
    %15 = sbr.rel (0) target = $region9
  $region8: #{tpu_custom_call.1} parent=0 // pred_region
    _
  $region9: #{tpu_custom_call.1} parent=0 // pred_fallthru
    _
  // Predicated region
  $region10: #{tpu_custom_call.1} parent=0 // pred_check
    _
  $region11: #{tpu_custom_call.1} parent=0 // pred_check_branch
    %17 = sbr.rel (0) target = $region13
  $region12: #{tpu_custom_call.1} parent=0 // pred_region
    _
  $region13: #{tpu_custom_call.1} parent=0 // pred_fallthru
    _
  // Predicated region
  $region14: #{tpu_custom_call.1} parent=0 // pred_check
    _
  $region15: #{tpu_custom_call.1} parent=0 // pred_check_branch
    %19 = sbr.rel (0) target = $region17
  $region16: #{tpu_custom_call.1} parent=0 // pred_region
    _
  $region17: #{tpu_custom_call.1} parent=0 // pred_fallthru
    _
  // Predicated region
  $region18: #{tpu_custom_call.1} parent=0 // pred_check
    _
  $region19: #{tpu_custom_call.1} parent=0 // pred_check_branch
    %21 = sbr.rel (0) target = $region21
  $region20: #{tpu_custom_call.1} parent=0 // pred_region
    _
  $region21: #{tpu_custom_call.1} parent=0 // pred_fallthru
    _
  %v22 = vld [vmem:[%s0] sm:$0x3]
  %v23 = vld [vmem:[%s1] sm:$0xff]
  %v24 = vld [vmem:[%s1 + $0x8] sm:$0xff]
  %v25 = vld [vmem:[%s1 + $0x10] sm:$0xff]
  %v26 = vld [vmem:[%s1 + $0x18] sm:$0xff]
  %v27 = vld [vmem:[%s3] sm:$0x1]
  %v29 = vlaneseq
  %v30 = vshrl.u32 %v29, 7
  %v31 = vsub.s32 0, %v30
  %v32 = vrot.slane %v27, %v31
  %vm34 = vcmask 261120
  %v36 = vsel %vm34, %v22, 0
  %38 = vmatprep.subr.mxu0 0.0
  %39 = vmatpush1.msra.mxu0 %v23
  %40 = vmatprep.subr.mxu0 0.0
  %41 = vmatpush1.msra.mxu0 %v24
  %42 = vmatprep.subr.mxu0 0.0
  %43 = vmatpush1.msra.mxu0 %v25
  %44 = vmatprep.subr.mxu0 0.0
  %45 = vmatpush1.msra.mxu0 %v26
  %46 = vmatprep.subr.mxu0 0.0
  %47 = vmatpush1.msra.mxu0 0.0
  %48 = vmatprep.subr.mxu0 0.0
  %49 = vmatpush1.msra.mxu0 0.0
  %50 = vmatprep.subr.mxu0 0.0
  %51 = vmatpush1.msra.mxu0 0.0
  %52 = vmatprep.subr.mxu0 0.0
  %53 = vmatpush1.msra.mxu0 0.0
  %54 = vmatprep.subr.mxu0 0.0
  %55 = vmatpush1.msra.mxu0 0.0
  %56 = vmatprep.subr.mxu0 0.0
  %57 = vmatpush1.msra.mxu0 0.0
  %58 = vmatprep.subr.mxu0 0.0
  %59 = vmatpush1.msra.mxu0 0.0
  %60 = vmatprep.subr.mxu0 0.0
  %61 = vmatpush1.msra.mxu0 0.0
  %62 = vmatprep.subr.mxu0 0.0
  %63 = vmatpush1.msra.mxu0 0.0
  %64 = vmatprep.subr.mxu0 0.0
  %65 = vmatpush1.msra.mxu0 0.0
  %66 = vmatprep.subr.mxu0 0.0
  %67 = vmatpush1.msra.mxu0 0.0
  %68 = vmatprep.subr.mxu0 0.0
  %69 = vmatpush1.msra.mxu0 0.0
  %70 = vmatprep.subr.mxu0 0.0
  %71 = vmatpush1.msra.mxu0 0.0
  %72 = vmatprep.subr.mxu0 0.0
  %73 = vmatpush1.msra.mxu0 0.0
  %74 = vmatprep.subr.mxu0 0.0
  %75 = vmatpush1.msra.mxu0 0.0
  %76 = vmatprep.subr.mxu0 0.0
  %77 = vmatpush1.msra.mxu0 0.0
  %78 = vmatprep.subr.mxu0 0.0
  %79 = vmatpush1.msra.mxu0 0.0
  %80 = vmatprep.subr.mxu0 0.0
  %81 = vmatpush1.msra.mxu0 0.0
  %82 = vmatprep.subr.mxu0 0.0
  %83 = vmatpush1.msra.mxu0 0.0
  %84 = vmatprep.subr.mxu0 0.0
  %85 = vmatpush1.msra.mxu0 0.0
  %86 = vmatprep.subr.mxu0 0.0
  %87 = vmatpush1.msra.mxu0 0.0
  %88 = vmatprep.subr.mxu0 0.0
  %89 = vmatpush1.msra.mxu0 0.0
  %90 = vmatprep.subr.mxu0 0.0
  %91 = vmatpush1.msra.mxu0 0.0
  %92 = vmatprep.subr.mxu0 0.0
  %93 = vmatpush1.msra.mxu0 0.0
  %94 = vmatprep.subr.mxu0 0.0
  %95 = vmatpush1.msra.mxu0 0.0
  %96 = vmatprep.subr.mxu0 0.0
  %97 = vmatpush1.msra.mxu0 0.0
  %98 = vmatprep.subr.mxu0 0.0
  %99 = vmatpush1.msra.mxu0 0.0
  %100 = vmatprep.subr.mxu0 0.0
  %101 = vmatpush1.msra.mxu0 0.0
  %102 = vmatprep.mubr.f32.mxu0 0.0
  %103 = vmatmul.mubr.f32.gmra.mrb[0].mxu0 %v36
  %v104 = vpop.f32.mrb[0].mxu0
  %v105 = vadd.f32 %v32, %v104
  %v106 = vpop.f32.mrb[0].mxu0
  %107 = vdwg.mxu0
  %v108 = vld [vmem:[%s2] sm:$0xff]
  %v109 = vld [vmem:[%s2 + $0x8] sm:$0xff]
  %v110 = vld [vmem:[%s2 + $0x10] sm:$0xff]
  %v111 = vld [vmem:[%s2 + $0x18] sm:$0xff]
  %v112 = vld [vmem:[%s4] sm:$0x1]
  %v114 = vlaneseq
  %v115 = vshrl.u32 %v114, 7
  %v116 = vsub.s32 0, %v115
  %v117 = vrot.slane %v112, %v116
  %119 = vmatprep.subr.mxu0 0.0
  %120 = vmatpush1.msra.mxu0 %v108
  %121 = vmatprep.subr.mxu0 0.0
  %122 = vmatpush1.msra.mxu0 %v109
  %123 = vmatprep.subr.mxu0 0.0
  %124 = vmatpush1.msra.mxu0 %v110
  %125 = vmatprep.subr.mxu0 0.0
  %126 = vmatpush1.msra.mxu0 %v111
  %127 = vmatprep.subr.mxu0 0.0
  %128 = vmatpush1.msra.mxu0 0.0
  %129 = vmatprep.subr.mxu0 0.0
  %130 = vmatpush1.msra.mxu0 0.0
  %131 = vmatprep.subr.mxu0 0.0
  %132 = vmatpush1.msra.mxu0 0.0
  %133 = vmatprep.subr.mxu0 0.0
  %134 = vmatpush1.msra.mxu0 0.0
  %135 = vmatprep.subr.mxu0 0.0
  %136 = vmatpush1.msra.mxu0 0.0
  %137 = vmatprep.subr.mxu0 0.0
  %138 = vmatpush1.msra.mxu0 0.0
  %139 = vmatprep.subr.mxu0 0.0
  %140 = vmatpush1.msra.mxu0 0.0
  %141 = vmatprep.subr.mxu0 0.0
  %142 = vmatpush1.msra.mxu0 0.0
  %143 = vmatprep.subr.mxu0 0.0
  %144 = vmatpush1.msra.mxu0 0.0
  %145 = vmatprep.subr.mxu0 0.0
  %146 = vmatpush1.msra.mxu0 0.0
  %147 = vmatprep.subr.mxu0 0.0
  %148 = vmatpush1.msra.mxu0 0.0
  %149 = vmatprep.subr.mxu0 0.0
  %150 = vmatpush1.msra.mxu0 0.0
  %151 = vmatprep.subr.mxu0 0.0
  %152 = vmatpush1.msra.mxu0 0.0
  %153 = vmatprep.subr.mxu0 0.0
  %154 = vmatpush1.msra.mxu0 0.0
  %155 = vmatprep.subr.mxu0 0.0
  %156 = vmatpush1.msra.mxu0 0.0
  %157 = vmatprep.subr.mxu0 0.0
  %158 = vmatpush1.msra.mxu0 0.0
  %159 = vmatprep.subr.mxu0 0.0
  %160 = vmatpush1.msra.mxu0 0.0
  %161 = vmatprep.subr.mxu0 0.0
  %162 = vmatpush1.msra.mxu0 0.0
  %163 = vmatprep.subr.mxu0 0.0
  %164 = vmatpush1.msra.mxu0 0.0
  %165 = vmatprep.subr.mxu0 0.0
  %166 = vmatpush1.msra.mxu0 0.0
  %167 = vmatprep.subr.mxu0 0.0
  %168 = vmatpush1.msra.mxu0 0.0
  %169 = vmatprep.subr.mxu0 0.0
  %170 = vmatpush1.msra.mxu0 0.0
  %171 = vmatprep.subr.mxu0 0.0
  %172 = vmatpush1.msra.mxu0 0.0
  %173 = vmatprep.subr.mxu0 0.0
  %174 = vmatpush1.msra.mxu0 0.0
  %175 = vmatprep.subr.mxu0 0.0
  %176 = vmatpush1.msra.mxu0 0.0
  %177 = vmatprep.subr.mxu0 0.0
  %178 = vmatpush1.msra.mxu0 0.0
  %179 = vmatprep.subr.mxu0 0.0
  %180 = vmatpush1.msra.mxu0 0.0
  %181 = vmatprep.subr.mxu0 0.0
  %182 = vmatpush1.msra.mxu0 0.0
  %183 = vmatprep.mubr.f32.mxu0 0.0
  %184 = vmatmul.mubr.f32.gmra.mrb[0].mxu0 %v36
  %v185 = vpop.f32.mrb[0].mxu0
  %v186 = vadd.f32 %v117, %v185
  %v187 = vpop.f32.mrb[0].mxu0
  %188 = vdwg.mxu0
  %v189 = vlaneseq
  %v190 = vshrl.u32 %v189, 7
  %v191 = vsub.s32 0, %v190
  %v192 = vrot.slane %v105, %v191
  %194 = vbcast.lane.b32.xlu0 %v192, 256
  %v195 = vpop.permute.xlu0 %194
  %s197 = sor.u32 256, 8
  %198 = vbcast.lane.b32.xlu0 %v192, %s197
  %v199 = vpop.permute.xlu0 %198
  %v200 = vlaneseq
  %v201 = vshrl.u32 %v200, 7
  %v202 = vsub.s32 1, %v201
  %v203 = vrot.slane %v105, %v202
  %205 = vbcast.lane.b32.xlu0 %v203, 256
  %v206 = vpop.permute.xlu0 %205
  %s208 = sor.u32 256, 8
  %209 = vbcast.lane.b32.xlu0 %v203, %s208
  %v210 = vpop.permute.xlu0 %209
  %vm211 = vcmask 7168
  %212 = vst.msk [vmem:[%s5] sm:$0xff] %vm211, %v195
  %213 = vst.msk [vmem:[%s5 + $0x8] sm:$0xff] %vm211, %v199
  %214 = vst.msk [vmem:[%s5 + $0x10] sm:$0xff] %vm211, %v206
  %215 = vst.msk [vmem:[%s5 + $0x18] sm:$0xff] %vm211, %v210
  %v216 = vlaneseq
  %v217 = vshrl.u32 %v216, 7
  %v218 = vsub.s32 0, %v217
  %v219 = vrot.slane %v186, %v218
  %221 = vbcast.lane.b32.xlu0 %v219, 256
  %v222 = vpop.permute.xlu0 %221
  %s224 = sor.u32 256, 8
  %225 = vbcast.lane.b32.xlu0 %v219, %s224
  %v226 = vpop.permute.xlu0 %225
  %v227 = vlaneseq
  %v228 = vshrl.u32 %v227, 7
  %v229 = vsub.s32 1, %v228
  %v230 = vrot.slane %v186, %v229
  %232 = vbcast.lane.b32.xlu0 %v230, 256
  %v233 = vpop.permute.xlu0 %232
  %s235 = sor.u32 256, 8
  %236 = vbcast.lane.b32.xlu0 %v230, %s235
  %v237 = vpop.permute.xlu0 %236
  %238 = vst.msk [vmem:[%s6] sm:$0xff] %vm211, %v222
  %239 = vst.msk [vmem:[%s6 + $0x8] sm:$0xff] %vm211, %v226
  %240 = vst.msk [vmem:[%s6 + $0x10] sm:$0xff] %vm211, %v233
  %241 = vst.msk [vmem:[%s6 + $0x18] sm:$0xff] %vm211, %v237
  // Predicated region
  $region22: #{tpu_custom_call.1} parent=0 // pred_check
    _
  $region23: #{tpu_custom_call.1} parent=0 // pred_check_branch
    %243 = sbr.rel (0) target = $region25
  $region24: #{tpu_custom_call.1} parent=0 // pred_region
    _
  $region25: #{tpu_custom_call.1} parent=0 // pred_fallthru
    _
  // Predicated region
  $region26: #{tpu_custom_call.1} parent=0 // pred_check
    _
  $region27: #{tpu_custom_call.1} parent=0 // pred_check_branch
    %245 = sbr.rel (0) target = $region29
  $region28: #{tpu_custom_call.1} parent=0 // pred_region
    _
  $region29: #{tpu_custom_call.1} parent=0 // pred_fallthru
    _
  // Predicated region
  $region30: #{tpu_custom_call.1} parent=0 // pred_check
    _
  $region31: #{tpu_custom_call.1} parent=0 // pred_check_branch
    %247 = sbr.rel (0) target = $region33
  $region32: #{tpu_custom_call.1} parent=0 // pred_region
    _
  $region33: #{tpu_custom_call.1} parent=0 // pred_fallthru
    _
  // Predicated region
  $region34: #{tpu_custom_call.1} parent=0 // pred_check
    _
  $region35: #{tpu_custom_call.1} parent=0 // pred_check_branch
    %249 = sbr.rel (0) target = $region37
  $region36: #{tpu_custom_call.1} parent=0 // pred_region
    _
  $region37: #{tpu_custom_call.1} parent=0 // pred_fallthru
    _

</llo_original>
